<compile_context>
chip_gen: v5e
topology: v5e:2x2
jax: 0.10.0
libtpu: 0.0.40
codegen_flags: <defaults>
</compile_context>

<pallas_src>
import math

import jax
import jax.numpy as jnp
from jax.experimental import pallas as pl
from jax.experimental.pallas import tpu as pltpu


def _abs_diff_kernel(out_ref, tgt_ref, res_ref):
    # Elementwise hot path on the VPU over the whole VMEM tile.
    res_ref[...] = jnp.abs(out_ref[...] - tgt_ref[...])


_LANE = 128
_MAX_LANE = 2048  # widest lane slab we try (16 vregs wide)

# Fused XLA fallback for ragged/tiny totals (already at HBM roofline, no copies).
_xla_abs_diff = jax.jit(lambda o, t: jnp.abs(o - t))


def _sublane_multiple(dtype) -> int:
    itemsize = jnp.dtype(dtype).itemsize
    if itemsize >= 4:
        return 8
    if itemsize == 2:
        return 16
    return 32


def _largest_lane_divisor(total: int, cap: int) -> int:
    """Largest multiple of 128 that divides `total`, capped at `cap` (0 if none)."""
    best = 0
    k = _LANE
    while k <= cap:
        if total % k == 0:
            best = k
        k += _LANE
    return best


def _chip_tiling_params():
    """(per-buffer block bytes target, vmem_limit_bytes), generation-aware."""
    try:
        vmem_cap = int(pltpu.get_tpu_info().vmem_capacity_bytes)
    except Exception:
        vmem_cap = 64 * 1024 * 1024  # conservative (v7x-sized) default
    if vmem_cap <= 64 * 1024 * 1024:
        # v7x-class: 64 MiB physical VMEM. 6 buffers x 4 MiB = 24 MiB footprint.
        return 4 * 1024 * 1024, 48 * 1024 * 1024
    # v5e/v6e-class: 128 MiB physical VMEM. 6 buffers x 8 MiB = 48 MiB footprint.
    return 8 * 1024 * 1024, 80 * 1024 * 1024


def pixel_anomaly_loss(outputs: jax.Array, targets: jax.Array) -> jax.Array:
    assert outputs.shape == targets.shape, "outputs/targets must match"
    orig_shape = outputs.shape
    dtype = outputs.dtype
    total = math.prod(orig_shape)

    sub_mult = _sublane_multiple(dtype)
    itemsize = jnp.dtype(dtype).itemsize

    lane = _largest_lane_divisor(total, _MAX_LANE)
    if total == 0 or lane == 0:
        # Ragged or empty element count: fused XLA elementwise is already at
        # HBM roofline with zero extra copies; pad+slice would only add traffic.
        return _xla_abs_diff(outputs, targets)

    rows = total // lane
    # ravel/reshape of a contiguous array is metadata only — no HBM copies.
    o2d = jnp.ravel(outputs).reshape(rows, lane)
    t2d = jnp.ravel(targets).reshape(rows, lane)

    tile_bytes_target, vmem_limit = _chip_tiling_params()

    # Large blocks (rounded to the packed-sublane multiple) to amortize the
    # fixed ~0.35 us per-grid-step overhead.
    block_rows = tile_bytes_target // (lane * itemsize)
    block_rows = max(sub_mult, (block_rows // sub_mult) * sub_mult)

    if rows >= 2 * sub_mult:
        # Guarantee >= 2 grid steps so the "parallel" axis can shard across
        # v7x's two TensorCores even when the whole array fits one block.
        half_rows = -(-rows // 2)  # cdiv(rows, 2)
        half_rows = ((half_rows + sub_mult - 1) // sub_mult) * sub_mult
        block_rows = min(block_rows, half_rows)
    else:
        block_rows = rows  # single full-extent block (always legal)

    block_rows = min(block_rows, rows)
    grid = (pl.cdiv(rows, block_rows),)

    result2d = pl.pallas_call(
        _abs_diff_kernel,
        out_shape=jax.ShapeDtypeStruct((rows, lane), dtype),
        grid_spec=pltpu.PrefetchScalarGridSpec(
            num_scalar_prefetch=0,
            grid=grid,
            in_specs=[
                pl.BlockSpec((block_rows, lane), lambda i: (i, 0)),
                pl.BlockSpec((block_rows, lane), lambda i: (i, 0)),
            ],
            out_specs=pl.BlockSpec((block_rows, lane), lambda i: (i, 0)),
        ),
        compiler_params=pltpu.CompilerParams(
            # Parallel grid axis -> sharded across the 2 TCs on v7x (no-op on
            # v5e/v6e). vmem_limit is generation-aware (see _chip_tiling_params).
            dimension_semantics=("parallel",),
            vmem_limit_bytes=vmem_limit,
        ),
        cost_estimate=pl.CostEstimate(
            flops=total,
            transcendentals=0,
            bytes_accessed=3 * total * itemsize,
        ),
    )(o2d, t2d)

    return result2d.reshape(orig_shape)


if __name__ == "__main__":
    key = jax.random.PRNGKey(0)
    k1, k2, k3, k4 = jax.random.split(key, 4)

    # NCHW inputs, small shapes: batch=2, channels=4, spatial=16x16
    outputs = jax.random.normal(k1, (2, 4, 16, 16), dtype=jnp.float32)
    targets = jax.random.normal(k2, (2, 4, 16, 16), dtype=jnp.float32)

    anomaly_scores = pixel_anomaly_loss(outputs, targets)
    anomaly_scores = jax.block_until_ready(anomaly_scores)

    ref = jnp.abs(outputs - targets)
    assert anomaly_scores.shape == ref.shape
    assert anomaly_scores.dtype == ref.dtype
    assert jnp.allclose(anomaly_scores, ref), "mismatch vs reference"

    # Larger input that exercises the >=2-grid-step path.
    ob = jax.random.normal(k3, (4, 8, 64, 128), dtype=jnp.float32)
    tb = jax.random.normal(k4, (4, 8, 64, 128), dtype=jnp.float32)
    rb = jax.block_until_ready(pixel_anomaly_loss(ob, tb))
    assert rb.shape == ob.shape and rb.dtype == ob.dtype
    assert jnp.allclose(rb, jnp.abs(ob - tb)), "mismatch vs reference (large)"

    # Ragged element count (not % 128) -> fused XLA fallback path.
    o2 = jax.random.normal(k3, (2, 3, 5, 7), dtype=jnp.float32)
    t2 = jax.random.normal(k4, (2, 3, 5, 7), dtype=jnp.float32)
    r2 = jax.block_until_ready(pixel_anomaly_loss(o2, t2))
    assert r2.shape == o2.shape and r2.dtype == o2.dtype
    assert jnp.allclose(r2, jnp.abs(o2 - t2)), "mismatch vs reference (ragged)"

    print("KERNEL_OK")
</pallas_src>

<mosaic_0001>
module attributes {stable_mosaic.version = 11 : i64} {
  func.func @_abs_diff_kernel(%arg0: i32, %arg1: memref<1x2048xf32, #tpu.memory_space<vmem>>, %arg2: memref<1x2048xf32, #tpu.memory_space<vmem>>, %arg3: memref<1x2048xf32, #tpu.memory_space<vmem>>) attributes {dimension_semantics = [#tpu.dimension_semantics<parallel>], iteration_bounds = array<i64: 1>, scalar_prefetch = 0 : i64, scratch_operands = 0 : i64, tpu.core_type = #tpu.core_type<tc>, window_params = [{transform_indices = @transform_0, window_bounds = array<i64: 1, 2048>}, {transform_indices = @transform_1, window_bounds = array<i64: 1, 2048>}, {transform_indices = @transform_2, window_bounds = array<i64: 1, 2048>}]} {
    %c0 = arith.constant 0 : index
    %c0_0 = arith.constant 0 : index
    %0 = vector.load %arg1[%c0, %c0_0] : memref<1x2048xf32, #tpu.memory_space<vmem>>, vector<1x2048xf32>
    %c0_1 = arith.constant 0 : index
    %c0_2 = arith.constant 0 : index
    %1 = vector.load %arg2[%c0_1, %c0_2] : memref<1x2048xf32, #tpu.memory_space<vmem>>, vector<1x2048xf32>
    %2 = arith.subf %0, %1 : vector<1x2048xf32>
    %3 = math.absf %2 : vector<1x2048xf32>
    %c0_3 = arith.constant 0 : index
    %c0_4 = arith.constant 0 : index
    %4 = vector.load %arg3[%c0_3, %c0_4] : memref<1x2048xf32, #tpu.memory_space<vmem>>, vector<1x2048xf32>
    tpu.vector_store %arg3[%c0_3, %c0_4], %3 {strides = array<i32>} : memref<1x2048xf32, #tpu.memory_space<vmem>>, vector<1x2048xf32>,
    return
  }
  func.func @transform_0(%arg0: i32) -> (i32, i32) {
    %c0_i32 = arith.constant 0 : i32
    %c0_i32_0 = arith.constant 0 : i32
    return %arg0, %c0_i32 : i32, i32
  }
  func.func @transform_1(%arg0: i32) -> (i32, i32) {
    %c0_i32 = arith.constant 0 : i32
    %c0_i32_0 = arith.constant 0 : i32
    return %arg0, %c0_i32 : i32, i32
  }
  func.func @transform_2(%arg0: i32) -> (i32, i32) {
    %c0_i32 = arith.constant 0 : i32
    %c0_i32_0 = arith.constant 0 : i32
    return %arg0, %c0_i32 : i32, i32
  }
}

</mosaic_0001>

<llo_original>
// kernel: tpu_custom_call.1
$region0: #{tpu_custom_call.1}
  #allocation0 [shape = 'u32[]', space=smem, size = 0x4, offset = 0x4, fixed_abs, tag = 'smem constant byte address 0x4 - core index']
  #allocation1 [shape = 'u32[72,128]{1,0:T(1,128)}', space=vmem, size = 0x9000, scoped, tag = 'internal scratch']
  %s0 = inlined_call_operand.hbm [shape: f32[1,2048], index: 0, kind: input, shape index: {}]
  %s1 = inlined_call_operand.hbm [shape: f32[1,2048], index: 1, kind: input, shape index: {}]
  %s2 = inlined_call_operand.hbm [shape: f32[1,2048], index: 2, kind: output, shape index: {}]
  %s3 = sld [smem:[#allocation0]]
  $region26: #{tpu_custom_call.1} parent=0
    _
  %s5 = ssub.s32 1, %s3
  %s6 = scalar_select 0, %s5, %s3
  $region1: #{tpu_custom_call.1} parent=0
    #allocation2 [shape = 'u8[8192]{0}', space=vmem, size = 0x2000, scoped, tag = 'input window, operand 0, single buffered']
    #allocation3 [shape = 's32[1]{0}', space=sflag, size = 0x4, scoped, tag = 'scoped memory for tpu_custom_call.1']
    #allocation4 [shape = 's32[1]{0}', space=sflag, size = 0x4, scoped, tag = 'scoped memory for tpu_custom_call.1']
    #allocation5 [shape = 'u8[8192]{0}', space=vmem, size = 0x2000, scoped, tag = 'input window, operand 1, single buffered']
    #allocation6 [shape = 's32[1]{0}', space=sflag, size = 0x4, scoped, tag = 'scoped memory for tpu_custom_call.1']
    #allocation7 [shape = 'u8[8192]{0}', space=vmem, size = 0x2000, scoped, tag = 'output window, operand 0, single buffered']
    %7 = vsyncpa [#allocation3], 0
    %8 = vsyncpa [#allocation6], 0
    %9 = vsyncpa [#allocation4], 0
    // Predicated region
    $region2: #{tpu_custom_call.1} parent=1 // pred_check
      _
    $region3: #{tpu_custom_call.1} parent=1 // pred_check_branch
      %11 = sbr.rel (0) target = $region5
    $region4: #{tpu_custom_call.1} parent=1 // pred_region
      %13 = vsyncadd [#allocation3], 0
      %s15 = sshll.u32 %s0, 4
      %s16 = int_to_ptr.hbm [resolvable:$true] %s15
      %s17 = sshll.u32 [#allocation2], 4
      %s18 = int_to_ptr.vmem [resolvable:$true] %s17
      %20 = dma.hbm_to_vmem [thread:$0]  %s16, 256, %s18, [#allocation3]
    $region5: #{tpu_custom_call.1} parent=1 // pred_fallthru
      _
    // Predicated region
    $region6: #{tpu_custom_call.1} parent=1 // pred_check
      _
    $region7: #{tpu_custom_call.1} parent=1 // pred_check_branch
      %22 = sbr.rel (0) target = $region9
    $region8: #{tpu_custom_call.1} parent=1 // pred_region
      %24 = vsyncadd [#allocation6], 0
      %s26 = sshll.u32 %s1, 4
      %s27 = int_to_ptr.hbm [resolvable:$true] %s26
      %s28 = sshll.u32 [#allocation5], 4
      %s29 = int_to_ptr.vmem [resolvable:$true] %s28
      %31 = dma.hbm_to_vmem [thread:$0]  %s27, 256, %s29, [#allocation6]
    $region9: #{tpu_custom_call.1} parent=1 // pred_fallthru
      _
    // Predicated region
    $region10: #{tpu_custom_call.1} parent=1 // pred_check
      _
    $region11: #{tpu_custom_call.1} parent=1 // pred_check_branch
      %33 = sbr.rel (0) target = $region13
    $region12: #{tpu_custom_call.1} parent=1 // pred_region
      %35 = dma.done [#allocation3], 256
    $region13: #{tpu_custom_call.1} parent=1 // pred_fallthru
      _
    // Predicated region
    $region14: #{tpu_custom_call.1} parent=1 // pred_check
      _
    $region15: #{tpu_custom_call.1} parent=1 // pred_check_branch
      %37 = sbr.rel (0) target = $region17
    $region16: #{tpu_custom_call.1} parent=1 // pred_region
      %39 = dma.done [#allocation6], 256
    $region17: #{tpu_custom_call.1} parent=1 // pred_fallthru
      _
    %v40 = vld [vmem:[#allocation2] sm:$0xff]
    %v41 = vld [vmem:[#allocation2 + $0x8] sm:$0xff]
    %v42 = vld [vmem:[#allocation5] sm:$0xff]
    %v43 = vld [vmem:[#allocation5 + $0x8] sm:$0xff]
    %v44 = vsub.f32 %v40, %v42
    %v45 = vsub.f32 %v41, %v43
    %v46 = vand.u32 2147483647, %v44
    %v47 = vand.u32 2147483647, %v45
    %48 = vst [vmem:[#allocation7] sm:$0xff] %v46
    %49 = vst [vmem:[#allocation7 + $0x8] sm:$0xff] %v47
    // Predicated region
    $region18: #{tpu_custom_call.1} parent=1 // pred_check
      _
    $region19: #{tpu_custom_call.1} parent=1 // pred_check_branch
      %51 = sbr.rel (0) target = $region21
    $region20: #{tpu_custom_call.1} parent=1 // pred_region
      %53 = vsyncadd [#allocation4], 0
      %s55 = sshll.u32 [#allocation7], 4
      %s56 = int_to_ptr.vmem [resolvable:$true] %s55
      %s57 = sshll.u32 %s2, 4
      %s58 = int_to_ptr.hbm [resolvable:$true] %s57
      %60 = dma.vmem_to_hbm [thread:$0]  %s56, 256, %s58, [#allocation4]
    $region21: #{tpu_custom_call.1} parent=1 // pred_fallthru
      _
    // Predicated region
    $region22: #{tpu_custom_call.1} parent=1 // pred_check
      _
    $region23: #{tpu_custom_call.1} parent=1 // pred_check_branch
      %62 = sbr.rel (0) target = $region25
    $region24: #{tpu_custom_call.1} parent=1 // pred_region
      %64 = dma.done [#allocation4], 256
    $region25: #{tpu_custom_call.1} parent=1 // pred_fallthru
      _
    %65 = vsyncpa [#allocation3], 1
    %66 = vsyncpa [#allocation6], 1
    %67 = vsyncpa [#allocation4], 1

</llo_original>
